<compile_context>
chip_gen: v5e
topology: v5e:2x2
jax: 0.10.0
libtpu: 0.0.40
codegen_flags: <defaults>
</compile_context>

<pallas_src>
import functools
import math

import jax
import jax.numpy as jnp
import numpy as np
from jax.experimental import pallas as pl
from jax.experimental.pallas import tpu as pltpu

BN_EPS = 1e-5
LANE = 128  # TPU lane width; output feature dims are padded to a multiple of this.


def _round_up(x, m):
    return ((x + m - 1) // m) * m


# --------------------------------------------------------------------------- #
# Kernel
# --------------------------------------------------------------------------- #
def _make_kernel(num_enc_layers, num_dec_layers, latent_dim, latent_pad):
    """Fused kernel: encoder -> softmax -> decoder for one batch tile.

    Ref layout (positional):
      x_ref,
      [encoder layer i: W_folded, b_folded] * num_enc_layers,
      [decoder layer i: W_folded, b_folded] * num_dec_layers,
      x_hat_out_ref, latent_out_ref
    BatchNorm is pre-folded into W/b, so each layer is dot + bias (+ ReLU).
    The last encoder / last decoder layers are zero-padded to 128 output lanes
    so both HBM stores are lane-dense (unmasked vst).
    """

    def kernel(x_ref, *refs):
        n_params = 2 * (num_enc_layers + num_dec_layers)
        x_hat_ref = refs[n_params]
        latent_ref = refs[n_params + 1]

        idx = 0
        h = x_ref[...]

        # ---------------- encoder ----------------
        for li in range(num_enc_layers):
            w = refs[idx][...]
            b = refs[idx + 1][...]
            idx += 2
            h = jnp.dot(h, w, preferred_element_type=jnp.float32) + b
            if li < num_enc_layers - 1:
                # Dropout is identity in eval mode; BN already folded into (w, b).
                h = jnp.maximum(h, 0.0)  # ReLU

        # Softmax over dim=1 (features). Logit lanes >= latent_dim are padding
        # (zero weight/bias columns) and must not enter the max/sum.
        if latent_pad > latent_dim:
            lane_ids = jax.lax.broadcasted_iota(jnp.int32, h.shape, 1)
            h = jnp.where(lane_ids < latent_dim, h, -1e30)
        m = jnp.max(h, axis=1, keepdims=True)
        e = jnp.exp(h - m)               # padded lanes -> exp(-1e30 - m) == 0
        denom = jnp.sum(e, axis=1, keepdims=True)
        latent = e * pl.reciprocal(denom, approx=True)  # EUP vrcp (free slot)

        # Early writeback: latent is final here; shortens its live range and lets
        # the output pipeline start before the decoder matmuls finish.
        latent_ref[...] = latent.astype(latent_ref.dtype)

        # ---------------- decoder ----------------
        # First decoder weight has zero-padded input rows, so the (zero) padded
        # latent lanes contribute nothing.
        h = latent
        for _ in range(num_dec_layers):
            w = refs[idx][...]
            b = refs[idx + 1][...]
            idx += 2
            h = jnp.dot(h, w, preferred_element_type=jnp.float32) + b
            h = jnp.maximum(h, 0.0)  # ReLU (BN folded, Dropout identity)

        x_hat_ref[...] = h.astype(x_hat_ref.dtype)

    return kernel


# --------------------------------------------------------------------------- #
# Parameters
# --------------------------------------------------------------------------- #
def init_params(key, encoder_dim):
    """Parameter init matching the PyTorch module's shapes.

    Linear: weight ~ U(-1/sqrt(fan_in), 1/sqrt(fan_in)), bias likewise,
            stored pre-transposed as [in, out].
    BatchNorm1d: gamma/beta/running stats are randomized slightly (as in a
                 trained model) so the eval-mode BN fold is actually exercised.
    Returns the *unfolded* parameter list.
    """
    dim = len(encoder_dim) - 1
    decoder_dim = list(reversed(encoder_dim))
    params = []

    def linear(key, fan_in, fan_out):
        k1, k2 = jax.random.split(key)
        bound = 1.0 / math.sqrt(fan_in)
        w = jax.random.uniform(k1, (fan_in, fan_out), jnp.float32, -bound, bound)
        b = jax.random.uniform(k2, (1, fan_out), jnp.float32, -bound, bound)
        return w, b

    def bn(key, width):
        k1, k2, k3, k4 = jax.random.split(key, 4)
        gamma = 1.0 + 0.1 * jax.random.normal(k1, (1, width), jnp.float32)
        beta = 0.1 * jax.random.normal(k2, (1, width), jnp.float32)
        rmean = 0.1 * jax.random.normal(k3, (1, width), jnp.float32)
        rvar = jnp.abs(1.0 + 0.1 * jax.random.normal(k4, (1, width), jnp.float32))
        return gamma, beta, rmean, rvar

    # encoder
    for i in range(dim):
        key, s1, s2 = jax.random.split(key, 3)
        w, b = linear(s1, encoder_dim[i], encoder_dim[i + 1])
        params += [w, b]
        if i < dim - 1:
            params += list(bn(s2, encoder_dim[i + 1]))

    # decoder
    for i in range(dim):
        key, s1, s2 = jax.random.split(key, 3)
        w, b = linear(s1, decoder_dim[i], decoder_dim[i + 1])
        params += [w, b]
        params += list(bn(s2, decoder_dim[i + 1]))

    return params


def fold_params(params, encoder_dim):
    """Folds eval-mode BatchNorm into the preceding Linear:
       W' = W * (gamma * rsqrt(rvar + eps));  b' = (b - rmean) * scale + beta."""
    dim = len(encoder_dim) - 1
    folded = []
    idx = 0
    # encoder: BN on all but last layer
    for i in range(dim):
        w, b = params[idx], params[idx + 1]
        idx += 2
        if i < dim - 1:
            g, be, rm, rv = params[idx:idx + 4]
            idx += 4
            scale = g * jax.lax.rsqrt(rv + BN_EPS)
            w = w * scale
            b = (b - rm) * scale + be
        folded += [w, b]
    # decoder: BN on every layer
    for _ in range(dim):
        w, b = params[idx], params[idx + 1]
        idx += 2
        g, be, rm, rv = params[idx:idx + 4]
        idx += 4
        scale = g * jax.lax.rsqrt(rv + BN_EPS)
        w = w * scale
        b = (b - rm) * scale + be
        folded += [w, b]
    return folded


def pad_for_lane_density(folded, encoder_dim, lane=LANE):
    """Zero-pads the output-facing layers so both kernel outputs are 128-lane dense:
       * encoder last layer:  output cols  latent_dim -> round_up(latent_dim, 128)
       * decoder first layer: input rows   latent_dim -> round_up(latent_dim, 128)
       * decoder last layer:  output cols  feat       -> round_up(feat, 128)
    Zero padding keeps the math exact (padded logit lanes are also masked pre-softmax)."""
    folded = list(folded)
    dim = len(encoder_dim) - 1
    feat = encoder_dim[0]
    latent_dim = encoder_dim[-1]
    latent_pad = _round_up(latent_dim, lane)
    feat_pad = _round_up(feat, lane)

    # encoder last layer: pad output columns.
    wi, bi = 2 * (dim - 1), 2 * (dim - 1) + 1
    folded[wi] = jnp.pad(folded[wi], ((0, 0), (0, latent_pad - latent_dim)))
    folded[bi] = jnp.pad(folded[bi], ((0, 0), (0, latent_pad - latent_dim)))
    # decoder first layer: pad input rows.
    wi = 2 * dim
    folded[wi] = jnp.pad(folded[wi], ((0, latent_pad - latent_dim), (0, 0)))
    # decoder last layer: pad output columns.
    wi, bi = 2 * (2 * dim - 1), 2 * (2 * dim - 1) + 1
    folded[wi] = jnp.pad(folded[wi], ((0, 0), (0, feat_pad - feat)))
    folded[bi] = jnp.pad(folded[bi], ((0, 0), (0, feat_pad - feat)))
    return folded


# --------------------------------------------------------------------------- #
# Wrapper
# --------------------------------------------------------------------------- #
@functools.partial(jax.jit, static_argnames=("encoder_dim", "block_rows"))
def autoencoder_forward(x, folded_padded_params, *, encoder_dim, block_rows=512):
    """Runs the fused, batch-tiled autoencoder kernel. Returns (x_hat, latent).

    block_rows: rows per grid step when the batch is large. On single-TC chips
    (v5e/v6e) prefer one large block (default covers small batches with a single
    block); on v7x pass block_rows ~= num/2 so the "parallel" axis shards across
    both TensorCores.
    """
    num, feat = x.shape
    dim = len(encoder_dim) - 1
    latent_dim = encoder_dim[-1]
    latent_pad = _round_up(latent_dim, LANE)
    feat_pad = _round_up(feat, LANE)

    # Batch tile: one block covering the whole (possibly non-multiple-of-8) batch
    # when it fits; otherwise block_rows-sized blocks with a ragged trailing block
    # (no jnp.pad of x -> no extra HBM copy; out_shape rows == num so garbage rows
    # in the trailing block are never stored).
    if num <= block_rows:
        tb = num
    else:
        tb = _round_up(block_rows, 8)
    grid = (pl.cdiv(num, tb),)

    # Input / output tiles move with the grid; weights stay resident (constant map).
    x_spec = pl.BlockSpec((tb, feat), lambda i: (i, 0))
    param_specs = [pl.BlockSpec(p.shape, lambda i: (0, 0)) for p in folded_padded_params]
    out_specs = (
        pl.BlockSpec((tb, feat_pad), lambda i: (i, 0)),      # x_hat (lane-padded)
        pl.BlockSpec((tb, latent_pad), lambda i: (i, 0)),    # latent (lane-padded)
    )

    # Derived VMEM budget. Pallas double-buffers every input (even constant-map
    # params), so params count x2; IO tiles are double-buffered as well.
    param_bytes = sum(int(np.prod(p.shape)) * p.dtype.itemsize for p in folded_padded_params)
    widest = max(max(encoder_dim), latent_pad, feat_pad)
    act_bytes = 6 * tb * widest * 4
    io_bytes = 2 * tb * (feat + feat_pad + latent_pad) * 4
    vmem_budget = int(min(max(2 * param_bytes + act_bytes + 2 * io_bytes + (4 << 20), 16 << 20),
                          100 << 20))

    kernel = _make_kernel(dim, dim, latent_dim, latent_pad)
    x_hat_p, latent_p = pl.pallas_call(
        kernel,
        grid=grid,
        out_shape=(
            jax.ShapeDtypeStruct((num, feat_pad), jnp.float32),
            jax.ShapeDtypeStruct((num, latent_pad), jnp.float32),
        ),
        in_specs=[x_spec] + param_specs,
        out_specs=out_specs,
        compiler_params=pltpu.CompilerParams(
            dimension_semantics=("parallel",),   # shards batch tiles across TCs on v7x
            vmem_limit_bytes=vmem_budget,
        ),
    )(x, *folded_padded_params)

    # Strip the lane padding (cheap XLA slices outside the kernel).
    return x_hat_p[:, :feat], latent_p[:, :latent_dim]


# --------------------------------------------------------------------------- #
# Pure-JAX reference (unfolded params, eval-mode semantics)
# --------------------------------------------------------------------------- #
def reference_forward(x, params, encoder_dim):
    dim = len(encoder_dim) - 1
    idx = 0
    h = x
    for i in range(dim):
        w, b = params[idx], params[idx + 1]
        idx += 2
        h = h @ w + b
        if i < dim - 1:
            g, be, rm, rv = params[idx:idx + 4]
            idx += 4
            h = (h - rm) / jnp.sqrt(rv + BN_EPS) * g + be
            h = jnp.maximum(h, 0.0)
    h = jax.nn.softmax(h, axis=1)
    latent = h
    for _ in range(dim):
        w, b, g, be, rm, rv = params[idx:idx + 6]
        idx += 6
        h = h @ w + b
        h = (h - rm) / jnp.sqrt(rv + BN_EPS) * g + be
        h = jnp.maximum(h, 0.0)
    return h, latent


if __name__ == "__main__":
    # Config consistent with the module: encoder_dim = [feat, hidden, latent].
    encoder_dim = (32, 64, 16)
    num = 200  # deliberately not a multiple of 8 (exercises the full-array block path)

    key = jax.random.PRNGKey(0)
    kx, kp = jax.random.split(key)
    x = jax.random.normal(kx, (num, encoder_dim[0]), jnp.float32)

    params = init_params(kp, encoder_dim)              # unfolded (PyTorch-like) params
    folded = fold_params(params, encoder_dim)          # BN folded into Linear W/b
    folded_padded = pad_for_lane_density(folded, encoder_dim)  # lane-dense outputs

    x_hat, latent = autoencoder_forward(x, folded_padded, encoder_dim=encoder_dim)
    jax.block_until_ready((x_hat, latent))

    x_hat_ref, latent_ref = reference_forward(x, params, encoder_dim)
    # Tolerances loosened vs exact math because the softmax divide uses the
    # approximate EUP reciprocal (pl.reciprocal(..., approx=True)).
    np.testing.assert_allclose(np.asarray(latent), np.asarray(latent_ref), rtol=5e-3, atol=1e-3)
    np.testing.assert_allclose(np.asarray(x_hat), np.asarray(x_hat_ref), rtol=5e-3, atol=2e-3)

    print("KERNEL_OK")
</pallas_src>

<mosaic_0001>
module attributes {stable_mosaic.version = 11 : i64} {
  func.func @kernel(%arg0: i32, %arg1: memref<200x32xf32, #tpu.memory_space<vmem>>, %arg2: memref<32x64xf32, #tpu.memory_space<vmem>>, %arg3: memref<1x64xf32, #tpu.memory_space<vmem>>, %arg4: memref<64x128xf32, #tpu.memory_space<vmem>>, %arg5: memref<1x128xf32, #tpu.memory_space<vmem>>, %arg6: memref<128x64xf32, #tpu.memory_space<vmem>>, %arg7: memref<1x64xf32, #tpu.memory_space<vmem>>, %arg8: memref<64x128xf32, #tpu.memory_space<vmem>>, %arg9: memref<1x128xf32, #tpu.memory_space<vmem>>, %arg10: memref<200x128xf32, #tpu.memory_space<vmem>>, %arg11: memref<200x128xf32, #tpu.memory_space<vmem>>) attributes {dimension_semantics = [#tpu.dimension_semantics<parallel>], iteration_bounds = array<i64: 1>, scalar_prefetch = 0 : i64, scratch_operands = 0 : i64, tpu.core_type = #tpu.core_type<tc>, window_params = [{transform_indices = @transform_0, window_bounds = array<i64: 200, 32>}, {pipeline_mode = #tpu.pipeline_mode<synchronous>, transform_indices = @transform_1, window_bounds = array<i64: 32, 64>}, {pipeline_mode = #tpu.pipeline_mode<synchronous>, transform_indices = @transform_2, window_bounds = array<i64: 1, 64>}, {pipeline_mode = #tpu.pipeline_mode<synchronous>, transform_indices = @transform_3, window_bounds = array<i64: 64, 128>}, {pipeline_mode = #tpu.pipeline_mode<synchronous>, transform_indices = @transform_4, window_bounds = array<i64: 1, 128>}, {pipeline_mode = #tpu.pipeline_mode<synchronous>, transform_indices = @transform_5, window_bounds = array<i64: 128, 64>}, {pipeline_mode = #tpu.pipeline_mode<synchronous>, transform_indices = @transform_6, window_bounds = array<i64: 1, 64>}, {pipeline_mode = #tpu.pipeline_mode<synchronous>, transform_indices = @transform_7, window_bounds = array<i64: 64, 128>}, {pipeline_mode = #tpu.pipeline_mode<synchronous>, transform_indices = @transform_8, window_bounds = array<i64: 1, 128>}, {transform_indices = @transform_9, window_bounds = array<i64: 200, 128>}, {transform_indices = @transform_10, window_bounds = array<i64: 200, 128>}]} {
    %c0 = arith.constant 0 : index
    %c0_0 = arith.constant 0 : index
    %0 = vector.load %arg1[%c0, %c0_0] : memref<200x32xf32, #tpu.memory_space<vmem>>, vector<200x32xf32>
    %c0_1 = arith.constant 0 : index
    %c0_2 = arith.constant 0 : index
    %1 = vector.load %arg2[%c0_1, %c0_2] : memref<32x64xf32, #tpu.memory_space<vmem>>, vector<32x64xf32>
    %c0_3 = arith.constant 0 : index
    %c0_4 = arith.constant 0 : index
    %2 = vector.load %arg3[%c0_3, %c0_4] : memref<1x64xf32, #tpu.memory_space<vmem>>, vector<1x64xf32>
    %cst = arith.constant dense<0.000000e+00> : vector<200x64xf32>
    %3 = tpu.matmul %0, %1, %cst {dimension_numbers = #tpu.dot_dimension_numbers<[1], [0], [0], [1], [0, 0, 1, 1], [], []>} : vector<200x32xf32>, vector<32x64xf32>, vector<200x64xf32> -> vector<200x64xf32>
    %4 = vector.broadcast %2 : vector<1x64xf32> to vector<200x64xf32>
    %5 = arith.addf %3, %4 : vector<200x64xf32>
    %cst_5 = arith.constant 0.000000e+00 : f32
    %6 = vector.broadcast %cst_5 : f32 to vector<200x64xf32>
    %7 = arith.maximumf %5, %6 : vector<200x64xf32>
    %c0_6 = arith.constant 0 : index
    %c0_7 = arith.constant 0 : index
    %8 = vector.load %arg4[%c0_6, %c0_7] : memref<64x128xf32, #tpu.memory_space<vmem>>, vector<64x128xf32>
    %c0_8 = arith.constant 0 : index
    %c0_9 = arith.constant 0 : index
    %9 = vector.load %arg5[%c0_8, %c0_9] : memref<1x128xf32, #tpu.memory_space<vmem>>, vector<1x128xf32>
    %cst_10 = arith.constant dense<0.000000e+00> : vector<200x128xf32>
    %10 = tpu.matmul %7, %8, %cst_10 {dimension_numbers = #tpu.dot_dimension_numbers<[1], [0], [0], [1], [0, 0, 1, 1], [], []>} : vector<200x64xf32>, vector<64x128xf32>, vector<200x128xf32> -> vector<200x128xf32>
    %11 = vector.broadcast %9 : vector<1x128xf32> to vector<200x128xf32>
    %12 = arith.addf %10, %11 : vector<200x128xf32>
    %13 = tpu.iota {dimensions = array<i32: 1>} : vector<200x128xi32>
    %c16_i32 = arith.constant 16 : i32
    %14 = vector.broadcast %c16_i32 : i32 to vector<200x128xi32>
    %15 = arith.cmpi slt, %13, %14 : vector<200x128xi32>
    %cst_11 = arith.constant -1.000000e+30 : f32
    %16 = vector.broadcast %cst_11 : f32 to vector<200x128xf32>
    %17 = arith.select %15, %12, %16 : vector<200x128xi1>, vector<200x128xf32>
    %cst_12 = arith.constant dense<0xFF800000> : vector<200xf32>
    %18 = vector.multi_reduction <maximumf>, %17, %cst_12 [1] : vector<200x128xf32> to vector<200xf32>
    %19 = vector.shape_cast %18 : vector<200xf32> to vector<200x1xf32>
    %20 = vector.broadcast %19 : vector<200x1xf32> to vector<200x128xf32>
    %21 = arith.subf %17, %20 : vector<200x128xf32>
    %22 = math.exp %21 : vector<200x128xf32>
    %cst_13 = arith.constant dense<0.000000e+00> : vector<200xf32>
    %23 = vector.multi_reduction <add>, %22, %cst_13 [1] : vector<200x128xf32> to vector<200xf32>
    %24 = vector.shape_cast %23 : vector<200xf32> to vector<200x1xf32>
    %25 = tpu.reciprocal %24 {approx = true} : vector<200x1xf32> -> vector<200x1xf32>
    %26 = vector.broadcast %25 : vector<200x1xf32> to vector<200x128xf32>
    %27 = arith.mulf %22, %26 : vector<200x128xf32>
    %c0_14 = arith.constant 0 : index
    %c0_15 = arith.constant 0 : index
    %28 = vector.load %arg11[%c0_14, %c0_15] : memref<200x128xf32, #tpu.memory_space<vmem>>, vector<200x128xf32>
    tpu.vector_store %arg11[%c0_14, %c0_15], %27 {strides = array<i32>} : memref<200x128xf32, #tpu.memory_space<vmem>>, vector<200x128xf32>,
    %c0_16 = arith.constant 0 : index
    %c0_17 = arith.constant 0 : index
    %29 = vector.load %arg6[%c0_16, %c0_17] : memref<128x64xf32, #tpu.memory_space<vmem>>, vector<128x64xf32>
    %c0_18 = arith.constant 0 : index
    %c0_19 = arith.constant 0 : index
    %30 = vector.load %arg7[%c0_18, %c0_19] : memref<1x64xf32, #tpu.memory_space<vmem>>, vector<1x64xf32>
    %cst_20 = arith.constant dense<0.000000e+00> : vector<200x64xf32>
    %31 = tpu.matmul %27, %29, %cst_20 {dimension_numbers = #tpu.dot_dimension_numbers<[1], [0], [0], [1], [0, 0, 1, 1], [], []>} : vector<200x128xf32>, vector<128x64xf32>, vector<200x64xf32> -> vector<200x64xf32>
    %32 = vector.broadcast %30 : vector<1x64xf32> to vector<200x64xf32>
    %33 = arith.addf %31, %32 : vector<200x64xf32>
    %cst_21 = arith.constant 0.000000e+00 : f32
    %34 = vector.broadcast %cst_21 : f32 to vector<200x64xf32>
    %35 = arith.maximumf %33, %34 : vector<200x64xf32>
    %c0_22 = arith.constant 0 : index
    %c0_23 = arith.constant 0 : index
    %36 = vector.load %arg8[%c0_22, %c0_23] : memref<64x128xf32, #tpu.memory_space<vmem>>, vector<64x128xf32>
    %c0_24 = arith.constant 0 : index
    %c0_25 = arith.constant 0 : index
    %37 = vector.load %arg9[%c0_24, %c0_25] : memref<1x128xf32, #tpu.memory_space<vmem>>, vector<1x128xf32>
    %cst_26 = arith.constant dense<0.000000e+00> : vector<200x128xf32>
    %38 = tpu.matmul %35, %36, %cst_26 {dimension_numbers = #tpu.dot_dimension_numbers<[1], [0], [0], [1], [0, 0, 1, 1], [], []>} : vector<200x64xf32>, vector<64x128xf32>, vector<200x128xf32> -> vector<200x128xf32>
    %39 = vector.broadcast %37 : vector<1x128xf32> to vector<200x128xf32>
    %40 = arith.addf %38, %39 : vector<200x128xf32>
    %cst_27 = arith.constant 0.000000e+00 : f32
    %41 = vector.broadcast %cst_27 : f32 to vector<200x128xf32>
    %42 = arith.maximumf %40, %41 : vector<200x128xf32>
    %c0_28 = arith.constant 0 : index
    %c0_29 = arith.constant 0 : index
    %43 = vector.load %arg10[%c0_28, %c0_29] : memref<200x128xf32, #tpu.memory_space<vmem>>, vector<200x128xf32>
    tpu.vector_store %arg10[%c0_28, %c0_29], %42 {strides = array<i32>} : memref<200x128xf32, #tpu.memory_space<vmem>>, vector<200x128xf32>,
    return
  }
  func.func @transform_0(%arg0: i32) -> (i32, i32) {
    %c0_i32 = arith.constant 0 : i32
    %c0_i32_0 = arith.constant 0 : i32
    return %arg0, %c0_i32 : i32, i32
  }
  func.func @transform_1(%arg0: i32) -> (i32, i32) {
    %c0_i32 = arith.constant 0 : i32
    %c0_i32_0 = arith.constant 0 : i32
    %c0_i32_1 = arith.constant 0 : i32
    return %c0_i32, %c0_i32_0 : i32, i32
  }
  func.func @transform_2(%arg0: i32) -> (i32, i32) {
    %c0_i32 = arith.constant 0 : i32
    %c0_i32_0 = arith.constant 0 : i32
    %c0_i32_1 = arith.constant 0 : i32
    return %c0_i32, %c0_i32_0 : i32, i32
  }
  func.func @transform_3(%arg0: i32) -> (i32, i32) {
    %c0_i32 = arith.constant 0 : i32
    %c0_i32_0 = arith.constant 0 : i32
    %c0_i32_1 = arith.constant 0 : i32
    return %c0_i32, %c0_i32_0 : i32, i32
  }
  func.func @transform_4(%arg0: i32) -> (i32, i32) {
    %c0_i32 = arith.constant 0 : i32
    %c0_i32_0 = arith.constant 0 : i32
    %c0_i32_1 = arith.constant 0 : i32
    return %c0_i32, %c0_i32_0 : i32, i32
  }
  func.func @transform_5(%arg0: i32) -> (i32, i32) {
    %c0_i32 = arith.constant 0 : i32
    %c0_i32_0 = arith.constant 0 : i32
    %c0_i32_1 = arith.constant 0 : i32
    return %c0_i32, %c0_i32_0 : i32, i32
  }
  func.func @transform_6(%arg0: i32) -> (i32, i32) {
    %c0_i32 = arith.constant 0 : i32
    %c0_i32_0 = arith.constant 0 : i32
    %c0_i32_1 = arith.constant 0 : i32
    return %c0_i32, %c0_i32_0 : i32, i32
  }
  func.func @transform_7(%arg0: i32) -> (i32, i32) {
    %c0_i32 = arith.constant 0 : i32
    %c0_i32_0 = arith.constant 0 : i32
    %c0_i32_1 = arith.constant 0 : i32
    return %c0_i32, %c0_i32_0 : i32, i32
  }
  func.func @transform_8(%arg0: i32) -> (i32, i32) {
    %c0_i32 = arith.constant 0 : i32
    %c0_i32_0 = arith.constant 0 : i32
    %c0_i32_1 = arith.constant 0 : i32
    return %c0_i32, %c0_i32_0 : i32, i32
  }
  func.func @transform_9(%arg0: i32) -> (i32, i32) {
    %c0_i32 = arith.constant 0 : i32
    %c0_i32_0 = arith.constant 0 : i32
    return %arg0, %c0_i32 : i32, i32
  }
  func.func @transform_10(%arg0: i32) -> (i32, i32) {
    %c0_i32 = arith.constant 0 : i32
    %c0_i32_0 = arith.constant 0 : i32
    return %arg0, %c0_i32 : i32, i32
  }
}

</mosaic_0001>

<llo_original>
// kernel: autoencoder_forward.1
$region0: #{autoencoder_forward.1}
  #allocation0 [shape = 'u32[]', space=smem, size = 0x4, offset = 0x4, fixed_abs, tag = 'smem constant byte address 0x4 - core index']
  #allocation1 [shape = 'u32[72,128]{1,0:T(1,128)}', space=vmem, size = 0x9000, scoped, tag = 'internal scratch']
  %s0 = inlined_call_operand.vmem [shape: f32[200,32], index: 0, kind: input, shape index: {}]
  %s1 = inlined_call_operand.vmem [shape: f32[32,64], index: 1, kind: input, shape index: {}]
  %s2 = inlined_call_operand.vmem [shape: f32[1,64], index: 2, kind: input, shape index: {}]
  %s3 = inlined_call_operand.vmem [shape: f32[64,128], index: 3, kind: input, shape index: {}]
  %s4 = inlined_call_operand.vmem [shape: f32[1,128], index: 4, kind: input, shape index: {}]
  %s5 = inlined_call_operand.vmem [shape: f32[128,64], index: 5, kind: input, shape index: {}]
  %s6 = inlined_call_operand.vmem [shape: f32[1,64], index: 6, kind: input, shape index: {}]
  %s7 = inlined_call_operand.vmem [shape: f32[64,128], index: 7, kind: input, shape index: {}]
  %s8 = inlined_call_operand.vmem [shape: f32[1,128], index: 8, kind: input, shape index: {}]
  %s9 = inlined_call_operand.vmem [shape: f32[200,128], index: 9, kind: output, shape index: {0}]
  %s10 = inlined_call_operand.vmem [shape: f32[200,128], index: 10, kind: output, shape index: {1}]
  %11 = xla_tuple %s9, %s10
  %s12 = sld [smem:[#allocation0]]
  $region54: #{autoencoder_forward.1} parent=0
    _
  %s14 = ssub.s32 1, %s12
  %s15 = scalar_select 0, %s14, %s12
  // Predicated region
  $region2: #{autoencoder_forward.1} parent=0 // pred_check
    _
  $region3: #{autoencoder_forward.1} parent=0 // pred_check_branch
    %17 = sbr.rel (0) target = $region5
  $region4: #{autoencoder_forward.1} parent=0 // pred_region
    _
  $region5: #{autoencoder_forward.1} parent=0 // pred_fallthru
    _
  // Predicated region
  $region6: #{autoencoder_forward.1} parent=0 // pred_check
    _
  $region7: #{autoencoder_forward.1} parent=0 // pred_check_branch
    %19 = sbr.rel (0) target = $region9
  $region8: #{autoencoder_forward.1} parent=0 // pred_region
    _
  $region9: #{autoencoder_forward.1} parent=0 // pred_fallthru
    _
  // Predicated region
  $region10: #{autoencoder_forward.1} parent=0 // pred_check
    _
  $region11: #{autoencoder_forward.1} parent=0 // pred_check_branch
    %21 = sbr.rel (0) target = $region13
  $region12: #{autoencoder_forward.1} parent=0 // pred_region
    _
  $region13: #{autoencoder_forward.1} parent=0 // pred_fallthru
    _
  // Predicated region
  $region14: #{autoencoder_forward.1} parent=0 // pred_check
    _
  $region15: #{autoencoder_forward.1} parent=0 // pred_check_branch
    %23 = sbr.rel (0) target = $region17
  $region16: #{autoencoder_forward.1} parent=0 // pred_region
    _
  $region17: #{autoencoder_forward.1} parent=0 // pred_fallthru
    _
  // Predicated region
  $region18: #{autoencoder_forward.1} parent=0 // pred_check
    _
  $region19: #{autoencoder_forward.1} parent=0 // pred_check_branch
    %25 = sbr.rel (0) target = $region21
  $region20: #{autoencoder_forward.1} parent=0 // pred_region
    _
  $region21: #{autoencoder_forward.1} parent=0 // pred_fallthru
    _
  // Predicated region
  $region22: #{autoencoder_forward.1} parent=0 // pred_check
    _
  $region23: #{autoencoder_forward.1} parent=0 // pred_check_branch
    %27 = sbr.rel (0) target = $region25
  $region24: #{autoencoder_forward.1} parent=0 // pred_region
    _
  $region25: #{autoencoder_forward.1} parent=0 // pred_fallthru
    _
  // Predicated region
  $region26: #{autoencoder_forward.1} parent=0 // pred_check
    _
  $region27: #{autoencoder_forward.1} parent=0 // pred_check_branch
    %29 = sbr.rel (0) target = $region29
  $region28: #{autoencoder_forward.1} parent=0 // pred_region
    _
  $region29: #{autoencoder_forward.1} parent=0 // pred_fallthru
    _
  // Predicated region
  $region30: #{autoencoder_forward.1} parent=0 // pred_check
    _
  $region31: #{autoencoder_forward.1} parent=0 // pred_check_branch
    %31 = sbr.rel (0) target = $region33
  $region32: #{autoencoder_forward.1} parent=0 // pred_region
    _
  $region33: #{autoencoder_forward.1} parent=0 // pred_fallthru
    _
  // Predicated region
  $region34: #{autoencoder_forward.1} parent=0 // pred_check
    _
  $region35: #{autoencoder_forward.1} parent=0 // pred_check_branch
    %33 = sbr.rel (0) target = $region37
  $region36: #{autoencoder_forward.1} parent=0 // pred_region
    _
  $region37: #{autoencoder_forward.1} parent=0 // pred_fallthru
    _
  %v34 = vld [vmem:[%s0] sm:$0xff]
  %v35 = vld [vmem:[%s0 + $0x8] sm:$0xff]
  %v36 = vld [vmem:[%s0 + $0x10] sm:$0xff]
  %v37 = vld [vmem:[%s0 + $0x18] sm:$0xff]
  %v38 = vld [vmem:[%s0 + $0x20] sm:$0xff]
  %v39 = vld [vmem:[%s0 + $0x28] sm:$0xff]
  %v40 = vld [vmem:[%s0 + $0x30] sm:$0xff]
  %v41 = vld [vmem:[%s0 + $0x38] sm:$0xff]
  %v42 = vld [vmem:[%s0 + $0x40] sm:$0xff]
  %v43 = vld [vmem:[%s0 + $0x48] sm:$0xff]
  %v44 = vld [vmem:[%s0 + $0x50] sm:$0xff]
  %v45 = vld [vmem:[%s0 + $0x58] sm:$0xff]
  %v46 = vld [vmem:[%s0 + $0x60] sm:$0xff]
  %v47 = vld [vmem:[%s0 + $0x68] sm:$0xff]
  %v48 = vld [vmem:[%s0 + $0x70] sm:$0xff]
  %v49 = vld [vmem:[%s0 + $0x78] sm:$0xff]
  %v50 = vld [vmem:[%s0 + $0x80] sm:$0xff]
  %v51 = vld [vmem:[%s0 + $0x88] sm:$0xff]
  %v52 = vld [vmem:[%s0 + $0x90] sm:$0xff]
  %v53 = vld [vmem:[%s0 + $0x98] sm:$0xff]
  %v54 = vld [vmem:[%s0 + $0xa0] sm:$0xff]
  %v55 = vld [vmem:[%s0 + $0xa8] sm:$0xff]
  %v56 = vld [vmem:[%s0 + $0xb0] sm:$0xff]
  %v57 = vld [vmem:[%s0 + $0xb8] sm:$0xff]
  %v58 = vld [vmem:[%s0 + $0xc0] sm:$0xff]
  %v59 = vld [vmem:[%s1] sm:$0xff]
  %v60 = vld [vmem:[%s1 + $0x8] sm:$0xff]
  %v61 = vld [vmem:[%s1 + $0x10] sm:$0xff]
  %v62 = vld [vmem:[%s1 + $0x18] sm:$0xff]
  %v63 = vld [vmem:[%s2] sm:$0x1]
  %v65 = vperm.slane %v63, 0
  %vm67 = vcmask 261120
  %v69 = vsel %vm67, %v34, 0
  %v72 = vsel %vm67, %v35, 0
  %v75 = vsel %vm67, %v36, 0
  %v78 = vsel %vm67, %v37, 0
  %v81 = vsel %vm67, %v38, 0
  %v84 = vsel %vm67, %v39, 0
  %v87 = vsel %vm67, %v40, 0
  %v90 = vsel %vm67, %v41, 0
  %v93 = vsel %vm67, %v42, 0
  %v96 = vsel %vm67, %v43, 0
  %v99 = vsel %vm67, %v44, 0
  %v102 = vsel %vm67, %v45, 0
  %v105 = vsel %vm67, %v46, 0
  %v108 = vsel %vm67, %v47, 0
  %v111 = vsel %vm67, %v48, 0
  %v114 = vsel %vm67, %v49, 0
  %v117 = vsel %vm67, %v50, 0
  %v120 = vsel %vm67, %v51, 0
  %v123 = vsel %vm67, %v52, 0
  %v126 = vsel %vm67, %v53, 0
  %v129 = vsel %vm67, %v54, 0
  %v132 = vsel %vm67, %v55, 0
  %v135 = vsel %vm67, %v56, 0
  %v138 = vsel %vm67, %v57, 0
  %v141 = vsel %vm67, %v58, 0
  %143 = vmatpush.msra.mxu0 0.0
  %144 = vmatpush.msra.mxu0 0.0
  %145 = vmatpush.msra.mxu0 0.0
  %146 = vmatpush.msra.mxu0 0.0
  %147 = vmatpush.msra.mxu0 0.0
  %148 = vmatpush.msra.mxu0 0.0
  %149 = vmatpush.msra.mxu0 0.0
  %150 = vmatpush.msra.mxu0 0.0
  %151 = vmatpush.msra.mxu0 0.0
  %152 = vmatpush.msra.mxu0 0.0
  %153 = vmatpush.msra.mxu0 0.0
  %154 = vmatpush.msra.mxu0 0.0
  %155 = vmatpush.msra.mxu0 %v62
  %156 = vmatpush.msra.mxu0 %v61
  %157 = vmatpush.msra.mxu0 %v60
  %158 = vmatpush.msra.mxu0 %v59
  %159 = vmatmul.f32.gmra.mxu0 %v69
  %v160 = vpop.f32.mrf.mxu0
  %v161 = vadd.f32 %v65, %v160
  %162 = vmatmul.f32.gmra.mxu0 %v72
  %v163 = vpop.f32.mrf.mxu0
  %v164 = vadd.f32 %v65, %v163
  %165 = vmatmul.f32.gmra.mxu0 %v75
  %v166 = vpop.f32.mrf.mxu0
  %v167 = vadd.f32 %v65, %v166
  %168 = vmatmul.f32.gmra.mxu0 %v78
  %v169 = vpop.f32.mrf.mxu0
  %v170 = vadd.f32 %v65, %v169
  %171 = vmatmul.f32.gmra.mxu0 %v81
  %v172 = vpop.f32.mrf.mxu0
  %v173 = vadd.f32 %v65, %v172
  %174 = vmatmul.f32.gmra.mxu0 %v84
  %v175 = vpop.f32.mrf.mxu0
  %v176 = vadd.f32 %v65, %v175
  %177 = vmatmul.f32.gmra.mxu0 %v87
  %v178 = vpop.f32.mrf.mxu0
  %v179 = vadd.f32 %v65, %v178
  %180 = vmatmul.f32.gmra.mxu0 %v90
  %v181 = vpop.f32.mrf.mxu0
  %v182 = vadd.f32 %v65, %v181
  %183 = vmatmul.f32.gmra.mxu0 %v93
  %v184 = vpop.f32.mrf.mxu0
  %v185 = vadd.f32 %v65, %v184
  %186 = vmatmul.f32.gmra.mxu0 %v96
  %v187 = vpop.f32.mrf.mxu0
  %v188 = vadd.f32 %v65, %v187
  %189 = vmatmul.f32.gmra.mxu0 %v99
  %v190 = vpop.f32.mrf.mxu0
  %v191 = vadd.f32 %v65, %v190
  %192 = vmatmul.f32.gmra.mxu0 %v102
  %v193 = vpop.f32.mrf.mxu0
  %v194 = vadd.f32 %v65, %v193
  %195 = vmatmul.f32.gmra.mxu0 %v105
  %v196 = vpop.f32.mrf.mxu0
  %v197 = vadd.f32 %v65, %v196
  %198 = vmatmul.f32.gmra.mxu0 %v108
  %v199 = vpop.f32.mrf.mxu0
  %v200 = vadd.f32 %v65, %v199
  %201 = vmatmul.f32.gmra.mxu0 %v111
  %v202 = vpop.f32.mrf.mxu0
  %v203 = vadd.f32 %v65, %v202
  %204 = vmatmul.f32.gmra.mxu0 %v114
  %v205 = vpop.f32.mrf.mxu0
  %v206 = vadd.f32 %v65, %v205
  %207 = vmatmul.f32.gmra.mxu0 %v117
  %v208 = vpop.f32.mrf.mxu0
  %v209 = vadd.f32 %v65, %v208
  %210 = vmatmul.f32.gmra.mxu0 %v120
  %v211 = vpop.f32.mrf.mxu0
  %v212 = vadd.f32 %v65, %v211
  %213 = vmatmul.f32.gmra.mxu0 %v123
  %v214 = vpop.f32.mrf.mxu0
  %v215 = vadd.f32 %v65, %v214
  %216 = vmatmul.f32.gmra.mxu0 %v126
  %v217 = vpop.f32.mrf.mxu0
  %v218 = vadd.f32 %v65, %v217
  %219 = vmatmul.f32.gmra.mxu0 %v129
  %v220 = vpop.f32.mrf.mxu0
  %v221 = vadd.f32 %v65, %v220
  %222 = vmatmul.f32.gmra.mxu0 %v132
  %v223 = vpop.f32.mrf.mxu0
  %v224 = vadd.f32 %v65, %v223
  %225 = vmatmul.f32.gmra.mxu0 %v135
  %v226 = vpop.f32.mrf.mxu0
  %v227 = vadd.f32 %v65, %v226
  %228 = vmatmul.f32.gmra.mxu0 %v138
  %v229 = vpop.f32.mrf.mxu0
  %v230 = vadd.f32 %v65, %v229
  %231 = vmatmul.f32.gmra.mxu0 %v141
  %v232 = vpop.f32.mrf.mxu0
  %v233 = vadd.f32 %v65, %v232
  %234 = vdwg.mxu0
  %v235 = vmax.f32 %v161, 0.0
  %v236 = vmax.f32 %v164, 0.0
  %v237 = vmax.f32 %v167, 0.0
  %v238 = vmax.f32 %v170, 0.0
  %v239 = vmax.f32 %v173, 0.0
  %v240 = vmax.f32 %v176, 0.0
  %v241 = vmax.f32 %v179, 0.0
  %v242 = vmax.f32 %v182, 0.0
  %v243 = vmax.f32 %v185, 0.0
  %v244 = vmax.f32 %v188, 0.0
  %v245 = vmax.f32 %v191, 0.0
  %v246 = vmax.f32 %v194, 0.0
  %v247 = vmax.f32 %v197, 0.0
  %v248 = vmax.f32 %v200, 0.0
  %v249 = vmax.f32 %v203, 0.0
  %v250 = vmax.f32 %v206, 0.0
  %v251 = vmax.f32 %v209, 0.0
  %v252 = vmax.f32 %v212, 0.0
  %v253 = vmax.f32 %v215, 0.0
  %v254 = vmax.f32 %v218, 0.0
  %v255 = vmax.f32 %v221, 0.0
  %v256 = vmax.f32 %v224, 0.0
  %v257 = vmax.f32 %v227, 0.0
  %v258 = vmax.f32 %v230, 0.0
  %v259 = vmax.f32 %v233, 0.0
  %v260 = vld [vmem:[%s3] sm:$0xff]
  %v261 = vld [vmem:[%s3 + $0x8] sm:$0xff]
  %v262 = vld [vmem:[%s3 + $0x10] sm:$0xff]
  %v263 = vld [vmem:[%s3 + $0x18] sm:$0xff]
  %v264 = vld [vmem:[%s3 + $0x20] sm:$0xff]
  %v265 = vld [vmem:[%s3 + $0x28] sm:$0xff]
  %v266 = vld [vmem:[%s3 + $0x30] sm:$0xff]
  %v267 = vld [vmem:[%s3 + $0x38] sm:$0xff]
  %v268 = vld [vmem:[%s4] sm:$0x1]
  %v270 = vperm.slane %v268, 0
  %vm272 = vcmask 523264
  %v274 = vsel %vm272, %v235, 0
  %v277 = vsel %vm272, %v236, 0
  %v280 = vsel %vm272, %v237, 0
  %v283 = vsel %vm272, %v238, 0
  %v286 = vsel %vm272, %v239, 0
  %v289 = vsel %vm272, %v240, 0
  %v292 = vsel %vm272, %v241, 0
  %v295 = vsel %vm272, %v242, 0
  %v298 = vsel %vm272, %v243, 0
  %v301 = vsel %vm272, %v244, 0
  %v304 = vsel %vm272, %v245, 0
  %v307 = vsel %vm272, %v246, 0
  %v310 = vsel %vm272, %v247, 0
  %v313 = vsel %vm272, %v248, 0
  %v316 = vsel %vm272, %v249, 0
  %v319 = vsel %vm272, %v250, 0
  %v322 = vsel %vm272, %v251, 0
  %v325 = vsel %vm272, %v252, 0
  %v328 = vsel %vm272, %v253, 0
  %v331 = vsel %vm272, %v254, 0
  %v334 = vsel %vm272, %v255, 0
  %v337 = vsel %vm272, %v256, 0
  %v340 = vsel %vm272, %v257, 0
  %v343 = vsel %vm272, %v258, 0
  %v346 = vsel %vm272, %v259, 0
  %348 = vmatpush.msra.mxu0 0.0
  %349 = vmatpush.msra.mxu0 0.0
  %350 = vmatpush.msra.mxu0 0.0
  %351 = vmatpush.msra.mxu0 0.0
  %352 = vmatpush.msra.mxu0 0.0
  %353 = vmatpush.msra.mxu0 0.0
  %354 = vmatpush.msra.mxu0 0.0
  %355 = vmatpush.msra.mxu0 0.0
  %356 = vmatpush.msra.mxu0 %v267
  %357 = vmatpush.msra.mxu0 %v266
  %358 = vmatpush.msra.mxu0 %v265
  %359 = vmatpush.msra.mxu0 %v264
  %360 = vmatpush.msra.mxu0 %v263
  %361 = vmatpush.msra.mxu0 %v262
  %362 = vmatpush.msra.mxu0 %v261
  %363 = vmatpush.msra.mxu0 %v260
  %364 = vmatmul.f32.gmra.mxu0 %v274
  %v365 = vpop.f32.mrf.mxu0
  %v366 = vadd.f32 %v270, %v365
  %367 = vmatmul.f32.gmra.mxu0 %v277
  %v368 = vpop.f32.mrf.mxu0
  %v369 = vadd.f32 %v270, %v368
  %370 = vmatmul.f32.gmra.mxu0 %v280
  %v371 = vpop.f32.mrf.mxu0
  %v372 = vadd.f32 %v270, %v371
  %373 = vmatmul.f32.gmra.mxu0 %v283
  %v374 = vpop.f32.mrf.mxu0
  %v375 = vadd.f32 %v270, %v374
  %376 = vmatmul.f32.gmra.mxu0 %v286
  %v377 = vpop.f32.mrf.mxu0
  %v378 = vadd.f32 %v270, %v377
  %379 = vmatmul.f32.gmra.mxu0 %v289
  %v380 = vpop.f32.mrf.mxu0
  %v381 = vadd.f32 %v270, %v380
  %382 = vmatmul.f32.gmra.mxu0 %v292
  %v383 = vpop.f32.mrf.mxu0
  %v384 = vadd.f32 %v270, %v383
  %385 = vmatmul.f32.gmra.mxu0 %v295
  %v386 = vpop.f32.mrf.mxu0
  %v387 = vadd.f32 %v270, %v386
  %388 = vmatmul.f32.gmra.mxu0 %v298
  %v389 = vpop.f32.mrf.mxu0
  %v390 = vadd.f32 %v270, %v389
  %391 = vmatmul.f32.gmra.mxu0 %v301
  %v392 = vpop.f32.mrf.mxu0
  %v393 = vadd.f32 %v270, %v392
  %394 = vmatmul.f32.gmra.mxu0 %v304
  %v395 = vpop.f32.mrf.mxu0
  %v396 = vadd.f32 %v270, %v395
  %397 = vmatmul.f32.gmra.mxu0 %v307
  %v398 = vpop.f32.mrf.mxu0
  %v399 = vadd.f32 %v270, %v398
  %400 = vmatmul.f32.gmra.mxu0 %v310
  %v401 = vpop.f32.mrf.mxu0
  %v402 = vadd.f32 %v270, %v401
  %403 = vmatmul.f32.gmra.mxu0 %v313
  %v404 = vpop.f32.mrf.mxu0
  %v405 = vadd.f32 %v270, %v404
  %406 = vmatmul.f32.gmra.mxu0 %v316
  %v407 = vpop.f32.mrf.mxu0
  %v408 = vadd.f32 %v270, %v407
  %409 = vmatmul.f32.gmra.mxu0 %v319
  %v410 = vpop.f32.mrf.mxu0
  %v411 = vadd.f32 %v270, %v410
  %412 = vmatmul.f32.gmra.mxu0 %v322
  %v413 = vpop.f32.mrf.mxu0
  %v414 = vadd.f32 %v270, %v413
  %415 = vmatmul.f32.gmra.mxu0 %v325
  %v416 = vpop.f32.mrf.mxu0
  %v417 = vadd.f32 %v270, %v416
  %418 = vmatmul.f32.gmra.mxu0 %v328
  %v419 = vpop.f32.mrf.mxu0
  %v420 = vadd.f32 %v270, %v419
  %421 = vmatmul.f32.gmra.mxu0 %v331
  %v422 = vpop.f32.mrf.mxu0
  %v423 = vadd.f32 %v270, %v422
  %424 = vmatmul.f32.gmra.mxu0 %v334
  %v425 = vpop.f32.mrf.mxu0
  %v426 = vadd.f32 %v270, %v425
  %427 = vmatmul.f32.gmra.mxu0 %v337
  %v428 = vpop.f32.mrf.mxu0
  %v429 = vadd.f32 %v270, %v428
  %430 = vmatmul.f32.gmra.mxu0 %v340
  %v431 = vpop.f32.mrf.mxu0
  %v432 = vadd.f32 %v270, %v431
  %433 = vmatmul.f32.gmra.mxu0 %v343
  %v434 = vpop.f32.mrf.mxu0
  %v435 = vadd.f32 %v270, %v434
  %436 = vmatmul.f32.gmra.mxu0 %v346
  %v437 = vpop.f32.mrf.mxu0
  %v438 = vadd.f32 %v270, %v437
  %439 = vdwg.mxu0
  %v440 = vlaneseq
  %v441 = vand.u32 %v440, 127
  %vm442 = vcmp.lt.s32.totalorder %v441, 16
  %v443 = vsel %vm442, %v366, -1e+30
  %v444 = vsel %vm442, %v369, -1e+30
  %v445 = vsel %vm442, %v372, -1e+30
  %v446 = vsel %vm442, %v375, -1e+30
  %v447 = vsel %vm442, %v378, -1e+30
  %v448 = vsel %vm442, %v381, -1e+30
  %v449 = vsel %vm442, %v384, -1e+30
  %v450 = vsel %vm442, %v387, -1e+30
  %v451 = vsel %vm442, %v390, -1e+30
  %v452 = vsel %vm442, %v393, -1e+30
  %v453 = vsel %vm442, %v396, -1e+30
  %v454 = vsel %vm442, %v399, -1e+30
  %v455 = vsel %vm442, %v402, -1e+30
  %v456 = vsel %vm442, %v405, -1e+30
  %v457 = vsel %vm442, %v408, -1e+30
  %v458 = vsel %vm442, %v411, -1e+30
  %v459 = vsel %vm442, %v414, -1e+30
  %v460 = vsel %vm442, %v417, -1e+30
  %v461 = vsel %vm442, %v420, -1e+30
  %v462 = vsel %vm442, %v423, -1e+30
  %v463 = vsel %vm442, %v426, -1e+30
  %v464 = vsel %vm442, %v429, -1e+30
  %v465 = vsel %vm442, %v432, -1e+30
  %v466 = vsel %vm442, %v435, -1e+30
  %v467 = vsel %vm442, %v438, -1e+30
  %468 = vmax.xlane.f32.xlu0 %v443
  %v469 = vpop.xlane.xlu0 %468
  %470 = vmax.xlane.f32.xlu0 %v444
  %v471 = vpop.xlane.xlu0 %470
  %472 = vmax.xlane.f32.xlu0 %v445
  %v473 = vpop.xlane.xlu0 %472
  %474 = vmax.xlane.f32.xlu0 %v446
  %v475 = vpop.xlane.xlu0 %474
  %476 = vmax.xlane.f32.xlu0 %v447
  %v477 = vpop.xlane.xlu0 %476
  %478 = vmax.xlane.f32.xlu0 %v448
  %v479 = vpop.xlane.xlu0 %478
  %480 = vmax.xlane.f32.xlu0 %v449
  %v481 = vpop.xlane.xlu0 %480
  %482 = vmax.xlane.f32.xlu0 %v450
  %v483 = vpop.xlane.xlu0 %482
  %484 = vmax.xlane.f32.xlu0 %v451
  %v485 = vpop.xlane.xlu0 %484
  %486 = vmax.xlane.f32.xlu0 %v452
  %v487 = vpop.xlane.xlu0 %486
  %488 = vmax.xlane.f32.xlu0 %v453
  %v489 = vpop.xlane.xlu0 %488
  %490 = vmax.xlane.f32.xlu0 %v454
  %v491 = vpop.xlane.xlu0 %490
  %492 = vmax.xlane.f32.xlu0 %v455
  %v493 = vpop.xlane.xlu0 %492
  %494 = vmax.xlane.f32.xlu0 %v456
  %v495 = vpop.xlane.xlu0 %494
  %496 = vmax.xlane.f32.xlu0 %v457
  %v497 = vpop.xlane.xlu0 %496
  %498 = vmax.xlane.f32.xlu0 %v458
  %v499 = vpop.xlane.xlu0 %498
  %500 = vmax.xlane.f32.xlu0 %v459
  %v501 = vpop.xlane.xlu0 %500
  %502 = vmax.xlane.f32.xlu0 %v460
  %v503 = vpop.xlane.xlu0 %502
  %504 = vmax.xlane.f32.xlu0 %v461
  %v505 = vpop.xlane.xlu0 %504
  %506 = vmax.xlane.f32.xlu0 %v462
  %v507 = vpop.xlane.xlu0 %506
  %508 = vmax.xlane.f32.xlu0 %v463
  %v509 = vpop.xlane.xlu0 %508
  %510 = vmax.xlane.f32.xlu0 %v464
  %v511 = vpop.xlane.xlu0 %510
  %512 = vmax.xlane.f32.xlu0 %v465
  %v513 = vpop.xlane.xlu0 %512
  %514 = vmax.xlane.f32.xlu0 %v466
  %v515 = vpop.xlane.xlu0 %514
  %516 = vmax.xlane.f32.xlu0 %v467
  %v517 = vpop.xlane.xlu0 %516
  %v518 = vsub.f32 %v443, %v469
  %v519 = vsub.f32 %v444, %v471
  %v520 = vsub.f32 %v445, %v473
  %v521 = vsub.f32 %v446, %v475
  %v522 = vsub.f32 %v447, %v477
  %v523 = vsub.f32 %v448, %v479
  %v524 = vsub.f32 %v449, %v481
  %v525 = vsub.f32 %v450, %v483
  %v526 = vsub.f32 %v451, %v485
  %v527 = vsub.f32 %v452, %v487
  %v528 = vsub.f32 %v453, %v489
  %v529 = vsub.f32 %v454, %v491
  %v530 = vsub.f32 %v455, %v493
  %v531 = vsub.f32 %v456, %v495
  %v532 = vsub.f32 %v457, %v497
  %v533 = vsub.f32 %v458, %v499
  %v534 = vsub.f32 %v459, %v501
  %v535 = vsub.f32 %v460, %v503
  %v536 = vsub.f32 %v461, %v505
  %v537 = vsub.f32 %v462, %v507
  %v538 = vsub.f32 %v463, %v509
  %v539 = vsub.f32 %v464, %v511
  %v540 = vsub.f32 %v465, %v513
  %v541 = vsub.f32 %v466, %v515
  %v542 = vsub.f32 %v467, %v517
  %v543 = vmul.f32 %v518, 1.442695
  %v544 = vpow.pop %v543
  %v545 = vmul.f32 %v519, 1.442695
  %v546 = vpow.pop %v545
  %v547 = vmul.f32 %v520, 1.442695
  %v548 = vpow.pop %v547
  %v549 = vmul.f32 %v521, 1.442695
  %v550 = vpow.pop %v549
  %v551 = vmul.f32 %v522, 1.442695
  %v552 = vpow.pop %v551
  %v553 = vmul.f32 %v523, 1.442695
  %v554 = vpow.pop %v553
  %v555 = vmul.f32 %v524, 1.442695
  %v556 = vpow.pop %v555
  %v557 = vmul.f32 %v525, 1.442695
  %v558 = vpow.pop %v557
  %v559 = vmul.f32 %v526, 1.442695
  %v560 = vpow.pop %v559
  %v561 = vmul.f32 %v527, 1.442695
  %v562 = vpow.pop %v561
  %v563 = vmul.f32 %v528, 1.442695
  %v564 = vpow.pop %v563
  %v565 = vmul.f32 %v529, 1.442695
  %v566 = vpow.pop %v565
  %v567 = vmul.f32 %v530, 1.442695
  %v568 = vpow.pop %v567
  %v569 = vmul.f32 %v531, 1.442695
  %v570 = vpow.pop %v569
  %v571 = vmul.f32 %v532, 1.442695
  %v572 = vpow.pop %v571
  %v573 = vmul.f32 %v533, 1.442695
  %v574 = vpow.pop %v573
  %v575 = vmul.f32 %v534, 1.442695
  %v576 = vpow.pop %v575
  %v577 = vmul.f32 %v535, 1.442695
  %v578 = vpow.pop %v577
  %v579 = vmul.f32 %v536, 1.442695
  %v580 = vpow.pop %v579
  %v581 = vmul.f32 %v537, 1.442695
  %v582 = vpow.pop %v581
  %v583 = vmul.f32 %v538, 1.442695
  %v584 = vpow.pop %v583
  %v585 = vmul.f32 %v539, 1.442695
  %v586 = vpow.pop %v585
  %v587 = vmul.f32 %v540, 1.442695
  %v588 = vpow.pop %v587
  %v589 = vmul.f32 %v541, 1.442695
  %v590 = vpow.pop %v589
  %v591 = vmul.f32 %v542, 1.442695
  %v592 = vpow.pop %v591
  %593 = vadd.xlane.f32.xlu0 %v544
  %v594 = vpop.xlane.xlu0 %593
  %595 = vadd.xlane.f32.xlu0 %v546
  %v596 = vpop.xlane.xlu0 %595
  %597 = vadd.xlane.f32.xlu0 %v548
  %v598 = vpop.xlane.xlu0 %597
  %599 = vadd.xlane.f32.xlu0 %v550
  %v600 = vpop.xlane.xlu0 %599
  %601 = vadd.xlane.f32.xlu0 %v552
  %v602 = vpop.xlane.xlu0 %601
  %603 = vadd.xlane.f32.xlu0 %v554
  %v604 = vpop.xlane.xlu0 %603
  %605 = vadd.xlane.f32.xlu0 %v556
  %v606 = vpop.xlane.xlu0 %605
  %607 = vadd.xlane.f32.xlu0 %v558
  %v608 = vpop.xlane.xlu0 %607
  %609 = vadd.xlane.f32.xlu0 %v560
  %v610 = vpop.xlane.xlu0 %609
  %611 = vadd.xlane.f32.xlu0 %v562
  %v612 = vpop.xlane.xlu0 %611
  %613 = vadd.xlane.f32.xlu0 %v564
  %v614 = vpop.xlane.xlu0 %613
  %615 = vadd.xlane.f32.xlu0 %v566
  %v616 = vpop.xlane.xlu0 %615
  %617 = vadd.xlane.f32.xlu0 %v568
  %v618 = vpop.xlane.xlu0 %617
  %619 = vadd.xlane.f32.xlu0 %v570
  %v620 = vpop.xlane.xlu0 %619
  %621 = vadd.xlane.f32.xlu0 %v572
  %v622 = vpop.xlane.xlu0 %621
  %623 = vadd.xlane.f32.xlu0 %v574
  %v624 = vpop.xlane.xlu0 %623
  %625 = vadd.xlane.f32.xlu0 %v576
  %v626 = vpop.xlane.xlu0 %625
  %627 = vadd.xlane.f32.xlu0 %v578
  %v628 = vpop.xlane.xlu0 %627
  %629 = vadd.xlane.f32.xlu0 %v580
  %v630 = vpop.xlane.xlu0 %629
  %631 = vadd.xlane.f32.xlu0 %v582
  %v632 = vpop.xlane.xlu0 %631
  %633 = vadd.xlane.f32.xlu0 %v584
  %v634 = vpop.xlane.xlu0 %633
  %635 = vadd.xlane.f32.xlu0 %v586
  %v636 = vpop.xlane.xlu0 %635
  %637 = vadd.xlane.f32.xlu0 %v588
  %v638 = vpop.xlane.xlu0 %637
  %639 = vadd.xlane.f32.xlu0 %v590
  %v640 = vpop.xlane.xlu0 %639
  %641 = vadd.xlane.f32.xlu0 %v592
  %v642 = vpop.xlane.xlu0 %641
  %v643 = vrcp.pop %v594
  %v644 = vrcp.pop %v596
  %v645 = vrcp.pop %v598
  %v646 = vrcp.pop %v600
  %v647 = vrcp.pop %v602
  %v648 = vrcp.pop %v604
  %v649 = vrcp.pop %v606
  %v650 = vrcp.pop %v608
  %v651 = vrcp.pop %v610
  %v652 = vrcp.pop %v612
  %v653 = vrcp.pop %v614
  %v654 = vrcp.pop %v616
  %v655 = vrcp.pop %v618
  %v656 = vrcp.pop %v620
  %v657 = vrcp.pop %v622
  %v658 = vrcp.pop %v624
  %v659 = vrcp.pop %v626
  %v660 = vrcp.pop %v628
  %v661 = vrcp.pop %v630
  %v662 = vrcp.pop %v632
  %v663 = vrcp.pop %v634
  %v664 = vrcp.pop %v636
  %v665 = vrcp.pop %v638
  %v666 = vrcp.pop %v640
  %v667 = vrcp.pop %v642
  %v668 = vmul.f32 %v544, %v643
  %v669 = vmul.f32 %v546, %v644
  %v670 = vmul.f32 %v548, %v645
  %v671 = vmul.f32 %v550, %v646
  %v672 = vmul.f32 %v552, %v647
  %v673 = vmul.f32 %v554, %v648
  %v674 = vmul.f32 %v556, %v649
  %v675 = vmul.f32 %v558, %v650
  %v676 = vmul.f32 %v560, %v651
  %v677 = vmul.f32 %v562, %v652
  %v678 = vmul.f32 %v564, %v653
  %v679 = vmul.f32 %v566, %v654
  %v680 = vmul.f32 %v568, %v655
  %v681 = vmul.f32 %v570, %v656
  %v682 = vmul.f32 %v572, %v657
  %v683 = vmul.f32 %v574, %v658
  %v684 = vmul.f32 %v576, %v659
  %v685 = vmul.f32 %v578, %v660
  %v686 = vmul.f32 %v580, %v661
  %v687 = vmul.f32 %v582, %v662
  %v688 = vmul.f32 %v584, %v663
  %v689 = vmul.f32 %v586, %v664
  %v690 = vmul.f32 %v588, %v665
  %v691 = vmul.f32 %v590, %v666
  %v692 = vmul.f32 %v592, %v667
  %693 = vst [vmem:[%s10] sm:$0xff] %v668
  %694 = vst [vmem:[%s10 + $0x8] sm:$0xff] %v669
  %695 = vst [vmem:[%s10 + $0x10] sm:$0xff] %v670
  %696 = vst [vmem:[%s10 + $0x18] sm:$0xff] %v671
  %697 = vst [vmem:[%s10 + $0x20] sm:$0xff] %v672
  %698 = vst [vmem:[%s10 + $0x28] sm:$0xff] %v673
  %699 = vst [vmem:[%s10 + $0x30] sm:$0xff] %v674
  %700 = vst [vmem:[%s10 + $0x38] sm:$0xff] %v675
  %701 = vst [vmem:[%s10 + $0x40] sm:$0xff] %v676
  %702 = vst [vmem:[%s10 + $0x48] sm:$0xff] %v677
  %703 = vst [vmem:[%s10 + $0x50] sm:$0xff] %v678
  %704 = vst [vmem:[%s10 + $0x58] sm:$0xff] %v679
  %705 = vst [vmem:[%s10 + $0x60] sm:$0xff] %v680
  %706 = vst [vmem:[%s10 + $0x68] sm:$0xff] %v681
  %707 = vst [vmem:[%s10 + $0x70] sm:$0xff] %v682
  %708 = vst [vmem:[%s10 + $0x78] sm:$0xff] %v683
  %709 = vst [vmem:[%s10 + $0x80] sm:$0xff] %v684
  %710 = vst [vmem:[%s10 + $0x88] sm:$0xff] %v685
  %711 = vst [vmem:[%s10 + $0x90] sm:$0xff] %v686
  %712 = vst [vmem:[%s10 + $0x98] sm:$0xff] %v687
  %713 = vst [vmem:[%s10 + $0xa0] sm:$0xff] %v688
  %714 = vst [vmem:[%s10 + $0xa8] sm:$0xff] %v689
  %715 = vst [vmem:[%s10 + $0xb0] sm:$0xff] %v690
  %716 = vst [vmem:[%s10 + $0xb8] sm:$0xff] %v691
  %717 = vst [vmem:[%s10 + $0xc0] sm:$0xff] %v692
  %v718 = vld [vmem:[%s5] sm:$0xff]
  %v719 = vld [vmem:[%s5 + $0x8] sm:$0xff]
  %v720 = vld [vmem:[%s5 + $0x10] sm:$0xff]
  %v721 = vld [vmem:[%s5 + $0x18] sm:$0xff]
  %v722 = vld [vmem:[%s5 + $0x20] sm:$0xff]
  %v723 = vld [vmem:[%s5 + $0x28] sm:$0xff]
  %v724 = vld [vmem:[%s5 + $0x30] sm:$0xff]
  %v725 = vld [vmem:[%s5 + $0x38] sm:$0xff]
  %v726 = vld [vmem:[%s5 + $0x40] sm:$0xff]
  %v727 = vld [vmem:[%s5 + $0x48] sm:$0xff]
  %v728 = vld [vmem:[%s5 + $0x50] sm:$0xff]
  %v729 = vld [vmem:[%s5 + $0x58] sm:$0xff]
  %v730 = vld [vmem:[%s5 + $0x60] sm:$0xff]
  %v731 = vld [vmem:[%s5 + $0x68] sm:$0xff]
  %v732 = vld [vmem:[%s5 + $0x70] sm:$0xff]
  %v733 = vld [vmem:[%s5 + $0x78] sm:$0xff]
  %v734 = vld [vmem:[%s6] sm:$0x1]
  %v736 = vperm.slane %v734, 0
  %738 = vmatpush.msra.mxu0 %v733
  %739 = vmatpush.msra.mxu0 %v732
  %740 = vmatpush.msra.mxu0 %v731
  %741 = vmatpush.msra.mxu0 %v730
  %742 = vmatpush.msra.mxu0 %v729
  %743 = vmatpush.msra.mxu0 %v728
  %744 = vmatpush.msra.mxu0 %v727
  %745 = vmatpush.msra.mxu0 %v726
  %746 = vmatpush.msra.mxu0 %v725
  %747 = vmatpush.msra.mxu0 %v724
  %748 = vmatpush.msra.mxu0 %v723
  %749 = vmatpush.msra.mxu0 %v722
  %750 = vmatpush.msra.mxu0 %v721
  %751 = vmatpush.msra.mxu0 %v720
  %752 = vmatpush.msra.mxu0 %v719
  %753 = vmatpush.msra.mxu0 %v718
  %754 = vmatmul.f32.gmra.mxu0 %v668
  %v755 = vpop.f32.mrf.mxu0
  %v756 = vadd.f32 %v736, %v755
  %757 = vmatmul.f32.gmra.mxu0 %v669
  %v758 = vpop.f32.mrf.mxu0
  %v759 = vadd.f32 %v736, %v758
  %760 = vmatmul.f32.gmra.mxu0 %v670
  %v761 = vpop.f32.mrf.mxu0
  %v762 = vadd.f32 %v736, %v761
  %763 = vmatmul.f32.gmra.mxu0 %v671
  %v764 = vpop.f32.mrf.mxu0
  %v765 = vadd.f32 %v736, %v764
  %766 = vmatmul.f32.gmra.mxu0 %v672
  %v767 = vpop.f32.mrf.mxu0
  %v768 = vadd.f32 %v736, %v767
  %769 = vmatmul.f32.gmra.mxu0 %v673
  %v770 = vpop.f32.mrf.mxu0
  %v771 = vadd.f32 %v736, %v770
  %772 = vmatmul.f32.gmra.mxu0 %v674
  %v773 = vpop.f32.mrf.mxu0
  %v774 = vadd.f32 %v736, %v773
  %775 = vmatmul.f32.gmra.mxu0 %v675
  %v776 = vpop.f32.mrf.mxu0
  %v777 = vadd.f32 %v736, %v776
  %778 = vmatmul.f32.gmra.mxu0 %v676
  %v779 = vpop.f32.mrf.mxu0
  %v780 = vadd.f32 %v736, %v779
  %781 = vmatmul.f32.gmra.mxu0 %v677
  %v782 = vpop.f32.mrf.mxu0
  %v783 = vadd.f32 %v736, %v782
  %784 = vmatmul.f32.gmra.mxu0 %v678
  %v785 = vpop.f32.mrf.mxu0
  %v786 = vadd.f32 %v736, %v785
  %787 = vmatmul.f32.gmra.mxu0 %v679
  %v788 = vpop.f32.mrf.mxu0
  %v789 = vadd.f32 %v736, %v788
  %790 = vmatmul.f32.gmra.mxu0 %v680
  %v791 = vpop.f32.mrf.mxu0
  %v792 = vadd.f32 %v736, %v791
  %793 = vmatmul.f32.gmra.mxu0 %v681
  %v794 = vpop.f32.mrf.mxu0
  %v795 = vadd.f32 %v736, %v794
  %796 = vmatmul.f32.gmra.mxu0 %v682
  %v797 = vpop.f32.mrf.mxu0
  %v798 = vadd.f32 %v736, %v797
  %799 = vmatmul.f32.gmra.mxu0 %v683
  %v800 = vpop.f32.mrf.mxu0
  %v801 = vadd.f32 %v736, %v800
  %802 = vmatmul.f32.gmra.mxu0 %v684
  %v803 = vpop.f32.mrf.mxu0
  %v804 = vadd.f32 %v736, %v803
  %805 = vmatmul.f32.gmra.mxu0 %v685
  %v806 = vpop.f32.mrf.mxu0
  %v807 = vadd.f32 %v736, %v806
  %808 = vmatmul.f32.gmra.mxu0 %v686
  %v809 = vpop.f32.mrf.mxu0
  %v810 = vadd.f32 %v736, %v809
  %811 = vmatmul.f32.gmra.mxu0 %v687
  %v812 = vpop.f32.mrf.mxu0
  %v813 = vadd.f32 %v736, %v812
  %814 = vmatmul.f32.gmra.mxu0 %v688
  %v815 = vpop.f32.mrf.mxu0
  %v816 = vadd.f32 %v736, %v815
  %817 = vmatmul.f32.gmra.mxu0 %v689
  %v818 = vpop.f32.mrf.mxu0
  %v819 = vadd.f32 %v736, %v818
  %820 = vmatmul.f32.gmra.mxu0 %v690
  %v821 = vpop.f32.mrf.mxu0
  %v822 = vadd.f32 %v736, %v821
  %823 = vmatmul.f32.gmra.mxu0 %v691
  %v824 = vpop.f32.mrf.mxu0
  %v825 = vadd.f32 %v736, %v824
  %826 = vmatmul.f32.gmra.mxu0 %v692
  %v827 = vpop.f32.mrf.mxu0
  %v828 = vadd.f32 %v736, %v827
  %829 = vdwg.mxu0
  %v830 = vmax.f32 %v756, 0.0
  %v831 = vmax.f32 %v759, 0.0
  %v832 = vmax.f32 %v762, 0.0
  %v833 = vmax.f32 %v765, 0.0
  %v834 = vmax.f32 %v768, 0.0
  %v835 = vmax.f32 %v771, 0.0
  %v836 = vmax.f32 %v774, 0.0
  %v837 = vmax.f32 %v777, 0.0
  %v838 = vmax.f32 %v780, 0.0
  %v839 = vmax.f32 %v783, 0.0
  %v840 = vmax.f32 %v786, 0.0
  %v841 = vmax.f32 %v789, 0.0
  %v842 = vmax.f32 %v792, 0.0
  %v843 = vmax.f32 %v795, 0.0
  %v844 = vmax.f32 %v798, 0.0
  %v845 = vmax.f32 %v801, 0.0
  %v846 = vmax.f32 %v804, 0.0
  %v847 = vmax.f32 %v807, 0.0
  %v848 = vmax.f32 %v810, 0.0
  %v849 = vmax.f32 %v813, 0.0
  %v850 = vmax.f32 %v816, 0.0
  %v851 = vmax.f32 %v819, 0.0
  %v852 = vmax.f32 %v822, 0.0
  %v853 = vmax.f32 %v825, 0.0
  %v854 = vmax.f32 %v828, 0.0
  %v855 = vld [vmem:[%s7] sm:$0xff]
  %v856 = vld [vmem:[%s7 + $0x8] sm:$0xff]
  %v857 = vld [vmem:[%s7 + $0x10] sm:$0xff]
  %v858 = vld [vmem:[%s7 + $0x18] sm:$0xff]
  %v859 = vld [vmem:[%s7 + $0x20] sm:$0xff]
  %v860 = vld [vmem:[%s7 + $0x28] sm:$0xff]
  %v861 = vld [vmem:[%s7 + $0x30] sm:$0xff]
  %v862 = vld [vmem:[%s7 + $0x38] sm:$0xff]
  %v863 = vld [vmem:[%s8] sm:$0x1]
  %v865 = vperm.slane %v863, 0
  %v868 = vsel %vm272, %v830, 0
  %v871 = vsel %vm272, %v831, 0
  %v874 = vsel %vm272, %v832, 0
  %v877 = vsel %vm272, %v833, 0
  %v880 = vsel %vm272, %v834, 0
  %v883 = vsel %vm272, %v835, 0
  %v886 = vsel %vm272, %v836, 0
  %v889 = vsel %vm272, %v837, 0
  %v892 = vsel %vm272, %v838, 0
  %v895 = vsel %vm272, %v839, 0
  %v898 = vsel %vm272, %v840, 0
  %v901 = vsel %vm272, %v841, 0
  %v904 = vsel %vm272, %v842, 0
  %v907 = vsel %vm272, %v843, 0
  %v910 = vsel %vm272, %v844, 0
  %v913 = vsel %vm272, %v845, 0
  %v916 = vsel %vm272, %v846, 0
  %v919 = vsel %vm272, %v847, 0
  %v922 = vsel %vm272, %v848, 0
  %v925 = vsel %vm272, %v849, 0
  %v928 = vsel %vm272, %v850, 0
  %v931 = vsel %vm272, %v851, 0
  %v934 = vsel %vm272, %v852, 0
  %v937 = vsel %vm272, %v853, 0
  %v940 = vsel %vm272, %v854, 0
  %942 = vmatpush.msra.mxu0 0.0
  %943 = vmatpush.msra.mxu0 0.0
  %944 = vmatpush.msra.mxu0 0.0
  %945 = vmatpush.msra.mxu0 0.0
  %946 = vmatpush.msra.mxu0 0.0
  %947 = vmatpush.msra.mxu0 0.0
  %948 = vmatpush.msra.mxu0 0.0
  %949 = vmatpush.msra.mxu0 0.0
  %950 = vmatpush.msra.mxu0 %v862
  %951 = vmatpush.msra.mxu0 %v861
  %952 = vmatpush.msra.mxu0 %v860
  %953 = vmatpush.msra.mxu0 %v859
  %954 = vmatpush.msra.mxu0 %v858
  %955 = vmatpush.msra.mxu0 %v857
  %956 = vmatpush.msra.mxu0 %v856
  %957 = vmatpush.msra.mxu0 %v855
  %958 = vmatmul.f32.gmra.mxu0 %v868
  %v959 = vpop.f32.mrf.mxu0
  %v960 = vadd.f32 %v865, %v959
  %961 = vmatmul.f32.gmra.mxu0 %v871
  %v962 = vpop.f32.mrf.mxu0
  %v963 = vadd.f32 %v865, %v962
  %964 = vmatmul.f32.gmra.mxu0 %v874
  %v965 = vpop.f32.mrf.mxu0
  %v966 = vadd.f32 %v865, %v965
  %967 = vmatmul.f32.gmra.mxu0 %v877
  %v968 = vpop.f32.mrf.mxu0
  %v969 = vadd.f32 %v865, %v968
  %970 = vmatmul.f32.gmra.mxu0 %v880
  %v971 = vpop.f32.mrf.mxu0
  %v972 = vadd.f32 %v865, %v971
  %973 = vmatmul.f32.gmra.mxu0 %v883
  %v974 = vpop.f32.mrf.mxu0
  %v975 = vadd.f32 %v865, %v974
  %976 = vmatmul.f32.gmra.mxu0 %v886
  %v977 = vpop.f32.mrf.mxu0
  %v978 = vadd.f32 %v865, %v977
  %979 = vmatmul.f32.gmra.mxu0 %v889
  %v980 = vpop.f32.mrf.mxu0
  %v981 = vadd.f32 %v865, %v980
  %982 = vmatmul.f32.gmra.mxu0 %v892
  %v983 = vpop.f32.mrf.mxu0
  %v984 = vadd.f32 %v865, %v983
  %985 = vmatmul.f32.gmra.mxu0 %v895
  %v986 = vpop.f32.mrf.mxu0
  %v987 = vadd.f32 %v865, %v986
  %988 = vmatmul.f32.gmra.mxu0 %v898
  %v989 = vpop.f32.mrf.mxu0
  %v990 = vadd.f32 %v865, %v989
  %991 = vmatmul.f32.gmra.mxu0 %v901
  %v992 = vpop.f32.mrf.mxu0
  %v993 = vadd.f32 %v865, %v992
  %994 = vmatmul.f32.gmra.mxu0 %v904
  %v995 = vpop.f32.mrf.mxu0
  %v996 = vadd.f32 %v865, %v995
  %997 = vmatmul.f32.gmra.mxu0 %v907
  %v998 = vpop.f32.mrf.mxu0
  %v999 = vadd.f32 %v865, %v998
  %1000 = vmatmul.f32.gmra.mxu0 %v910
  %v1001 = vpop.f32.mrf.mxu0
  %v1002 = vadd.f32 %v865, %v1001
  %1003 = vmatmul.f32.gmra.mxu0 %v913
  %v1004 = vpop.f32.mrf.mxu0
  %v1005 = vadd.f32 %v865, %v1004
  %1006 = vmatmul.f32.gmra.mxu0 %v916
  %v1007 = vpop.f32.mrf.mxu0
  %v1008 = vadd.f32 %v865, %v1007
  %1009 = vmatmul.f32.gmra.mxu0 %v919
  %v1010 = vpop.f32.mrf.mxu0
  %v1011 = vadd.f32 %v865, %v1010
  %1012 = vmatmul.f32.gmra.mxu0 %v922
  %v1013 = vpop.f32.mrf.mxu0
  %v1014 = vadd.f32 %v865, %v1013
  %1015 = vmatmul.f32.gmra.mxu0 %v925
  %v1016 = vpop.f32.mrf.mxu0
  %v1017 = vadd.f32 %v865, %v1016
  %1018 = vmatmul.f32.gmra.mxu0 %v928
  %v1019 = vpop.f32.mrf.mxu0
  %v1020 = vadd.f32 %v865, %v1019
  %1021 = vmatmul.f32.gmra.mxu0 %v931
  %v1022 = vpop.f32.mrf.mxu0
  %v1023 = vadd.f32 %v865, %v1022
  %1024 = vmatmul.f32.gmra.mxu0 %v934
  %v1025 = vpop.f32.mrf.mxu0
  %v1026 = vadd.f32 %v865, %v1025
  %1027 = vmatmul.f32.gmra.mxu0 %v937
  %v1028 = vpop.f32.mrf.mxu0
  %v1029 = vadd.f32 %v865, %v1028
  %1030 = vmatmul.f32.gmra.mxu0 %v940
  %v1031 = vpop.f32.mrf.mxu0
  %v1032 = vadd.f32 %v865, %v1031
  %1033 = vdwg.mxu0
  %v1034 = vmax.f32 %v960, 0.0
  %v1035 = vmax.f32 %v963, 0.0
  %v1036 = vmax.f32 %v966, 0.0
  %v1037 = vmax.f32 %v969, 0.0
  %v1038 = vmax.f32 %v972, 0.0
  %v1039 = vmax.f32 %v975, 0.0
  %v1040 = vmax.f32 %v978, 0.0
  %v1041 = vmax.f32 %v981, 0.0
  %v1042 = vmax.f32 %v984, 0.0
  %v1043 = vmax.f32 %v987, 0.0
  %v1044 = vmax.f32 %v990, 0.0
  %v1045 = vmax.f32 %v993, 0.0
  %v1046 = vmax.f32 %v996, 0.0
  %v1047 = vmax.f32 %v999, 0.0
  %v1048 = vmax.f32 %v1002, 0.0
  %v1049 = vmax.f32 %v1005, 0.0
  %v1050 = vmax.f32 %v1008, 0.0
  %v1051 = vmax.f32 %v1011, 0.0
  %v1052 = vmax.f32 %v1014, 0.0
  %v1053 = vmax.f32 %v1017, 0.0
  %v1054 = vmax.f32 %v1020, 0.0
  %v1055 = vmax.f32 %v1023, 0.0
  %v1056 = vmax.f32 %v1026, 0.0
  %v1057 = vmax.f32 %v1029, 0.0
  %v1058 = vmax.f32 %v1032, 0.0
  %1059 = vst [vmem:[%s9] sm:$0xff] %v1034
  %1060 = vst [vmem:[%s9 + $0x8] sm:$0xff] %v1035
  %1061 = vst [vmem:[%s9 + $0x10] sm:$0xff] %v1036
  %1062 = vst [vmem:[%s9 + $0x18] sm:$0xff] %v1037
  %1063 = vst [vmem:[%s9 + $0x20] sm:$0xff] %v1038
  %1064 = vst [vmem:[%s9 + $0x28] sm:$0xff] %v1039
  %1065 = vst [vmem:[%s9 + $0x30] sm:$0xff] %v1040
  %1066 = vst [vmem:[%s9 + $0x38] sm:$0xff] %v1041
  %1067 = vst [vmem:[%s9 + $0x40] sm:$0xff] %v1042
  %1068 = vst [vmem:[%s9 + $0x48] sm:$0xff] %v1043
  %1069 = vst [vmem:[%s9 + $0x50] sm:$0xff] %v1044
  %1070 = vst [vmem:[%s9 + $0x58] sm:$0xff] %v1045
  %1071 = vst [vmem:[%s9 + $0x60] sm:$0xff] %v1046
  %1072 = vst [vmem:[%s9 + $0x68] sm:$0xff] %v1047
  %1073 = vst [vmem:[%s9 + $0x70] sm:$0xff] %v1048
  %1074 = vst [vmem:[%s9 + $0x78] sm:$0xff] %v1049
  %1075 = vst [vmem:[%s9 + $0x80] sm:$0xff] %v1050
  %1076 = vst [vmem:[%s9 + $0x88] sm:$0xff] %v1051
  %1077 = vst [vmem:[%s9 + $0x90] sm:$0xff] %v1052
  %1078 = vst [vmem:[%s9 + $0x98] sm:$0xff] %v1053
  %1079 = vst [vmem:[%s9 + $0xa0] sm:$0xff] %v1054
  %1080 = vst [vmem:[%s9 + $0xa8] sm:$0xff] %v1055
  %1081 = vst [vmem:[%s9 + $0xb0] sm:$0xff] %v1056
  %1082 = vst [vmem:[%s9 + $0xb8] sm:$0xff] %v1057
  %1083 = vst [vmem:[%s9 + $0xc0] sm:$0xff] %v1058
  // Predicated region
  $region38: #{autoencoder_forward.1} parent=0 // pred_check
    _
  $region39: #{autoencoder_forward.1} parent=0 // pred_check_branch
    %1085 = sbr.rel (0) target = $region41
  $region40: #{autoencoder_forward.1} parent=0 // pred_region
    _
  $region41: #{autoencoder_forward.1} parent=0 // pred_fallthru
    _
  // Predicated region
  $region42: #{autoencoder_forward.1} parent=0 // pred_check
    _
  $region43: #{autoencoder_forward.1} parent=0 // pred_check_branch
    %1087 = sbr.rel (0) target = $region45
  $region44: #{autoencoder_forward.1} parent=0 // pred_region
    _
  $region45: #{autoencoder_forward.1} parent=0 // pred_fallthru
    _
  // Predicated region
  $region46: #{autoencoder_forward.1} parent=0 // pred_check
    _
  $region47: #{autoencoder_forward.1} parent=0 // pred_check_branch
    %1089 = sbr.rel (0) target = $region49
  $region48: #{autoencoder_forward.1} parent=0 // pred_region
    _
  $region49: #{autoencoder_forward.1} parent=0 // pred_fallthru
    _
  // Predicated region
  $region50: #{autoencoder_forward.1} parent=0 // pred_check
    _
  $region51: #{autoencoder_forward.1} parent=0 // pred_check_branch
    %1091 = sbr.rel (0) target = $region53
  $region52: #{autoencoder_forward.1} parent=0 // pred_region
    _
  $region53: #{autoencoder_forward.1} parent=0 // pred_fallthru
    _

</llo_original>
